<compile_context>
chip_gen: v5e
topology: v5e:2x2
jax: 0.10.0
libtpu: 0.0.40
codegen_flags: <defaults>
</compile_context>

<pallas_src>
import functools
import math

import jax
import jax.numpy as jnp
from jax.experimental import pallas as pl
from jax.experimental.pallas import tpu as pltpu


_NEG_INF = -1e30
_NORM_EPS = 1e-12       # F.normalize(p=2, dim=1) default eps, max(.,eps) semantics
_CLIP_EPS = 1e-7        # torch.clamp(cosine, -1+1e-7, 1-1e-7)


def _arcface_kernel(emb_ref, w_ref, winv_ref, labels_ref, loss_ref,
                    en_ref, m_ref, l_ref, t_ref,
                    *, s, s_cos_m, s_sin_m,
                    num_classes, num_classes_padded,
                    num_rows, num_rows_padded):
    j = pl.program_id(0)
    c_tile = w_ref.shape[0]

    # ---- init (first class tile): normalize embeddings once, zero accumulators.
    @pl.when(j == 0)
    def _init():
        e = emb_ref[...].astype(jnp.float32)
        norm = jnp.sqrt(jnp.sum(e * e, axis=1, keepdims=True))
        e_n = e / jnp.maximum(norm, _NORM_EPS)
        en_ref[...] = e_n.astype(en_ref.dtype)
        m_ref[...] = jnp.full_like(m_ref, _NEG_INF)
        l_ref[...] = jnp.zeros_like(l_ref)
        t_ref[...] = jnp.zeros_like(t_ref)

    # ---- cosine for this class tile: (B, D) . (C_TILE, D)^T on the MXU with
    #      f32 accumulation, then per-column scale by 1/max(||w||, eps).
    dot = jax.lax.dot_general(
        en_ref[...], w_ref[...],
        dimension_numbers=(((1,), (1,)), ((), ())),
        preferred_element_type=jnp.float32)              # (B, C_TILE)
    cosine = dot * winv_ref[...]
    c = jnp.clip(cosine, -1.0 + _CLIP_EPS, 1.0 - _CLIP_EPS)

    # cos(acos(c) + m) = c*cos(m) - sqrt(1 - c^2)*sin(m);  s folded in.
    sin_theta = jnp.sqrt(jnp.maximum(1.0 - c * c, 0.0))
    base = c * s                                         # s * cos(theta)
    margined = c * s_cos_m - sin_theta * s_sin_m         # s * cos(theta + m)

    class_ids = jax.lax.broadcasted_iota(jnp.int32, c.shape, 1) + j * c_tile
    one_hot = labels_ref[...] == class_ids               # (B,1) == (B,C_TILE)
    logits = jnp.where(one_hot, margined, base)
    if num_classes_padded != num_classes:
        # Padded class columns must not contribute to the LSE.
        logits = jnp.where(class_ids < num_classes, logits, _NEG_INF)

    # ---- online (flash-style) log-sum-exp + target-logit accumulation.
    tile_max = jnp.max(logits, axis=1, keepdims=True)
    m_new = jnp.maximum(m_ref[...], tile_max)
    alpha = jnp.exp(m_ref[...] - m_new)
    p = jnp.exp(logits - m_new)
    l_ref[...] = alpha * l_ref[...] + jnp.sum(p, axis=1, keepdims=True)
    t_ref[...] += jnp.sum(jnp.where(one_hot, logits, 0.0), axis=1, keepdims=True)
    m_ref[...] = m_new

    # ---- finalize (last class tile): mean over the real batch rows.
    @pl.when(j == pl.num_programs(0) - 1)
    def _finalize():
        per_row = m_ref[...] + jnp.log(l_ref[...]) - t_ref[...]   # (B_pad, 1)
        if num_rows_padded != num_rows:
            row_ids = jax.lax.broadcasted_iota(jnp.int32, per_row.shape, 0)
            per_row = jnp.where(row_ids < num_rows, per_row, 0.0)
        loss_ref[...] = jnp.sum(per_row, keepdims=True) * (1.0 / num_rows)


def arcface_loss(embeddings, weight, labels, *, s=30.0, m=0.5,
                 c_tile=None, matmul_dtype=jnp.float32):
    """ArcFace loss (mean cross-entropy), forward only.

    embeddings: (B, D) f32, weight: (C, D), labels: (B,) int.
    matmul_dtype: dtype the normalized embeddings / streamed weight use on the
      MXU (f32 for exact parity with the reference, bf16 to halve HBM bytes).
    """
    B, D = embeddings.shape
    C, D2 = weight.shape
    assert D == D2
    itemsize = jnp.dtype(matmul_dtype).itemsize

    # ---- class-tile sizing: keep the double-buffered weight stream <= ~24 MiB
    #      so it fits v7x's 64 MiB VMEM (v5e/v6e have plenty of headroom).
    if c_tile is None:
        budget = 24 * 1024 * 1024
        max_ct = max(128, (budget // (2 * D * itemsize)) // 128 * 128)
        c_tile = int(min(max_ct, pl.cdiv(C, 128) * 128))
    assert c_tile % 128 == 0
    C_pad = int(pl.cdiv(C, c_tile)) * c_tile
    B_pad = int(pl.cdiv(B, 8)) * 8

    # ---- wrapper-side prep (cheap, one pass over W): exact per-class inverse
    #      norms in f32, optional cast of the streamed operands, padding.
    w32 = weight.astype(jnp.float32)
    w_norm = jnp.sqrt(jnp.sum(w32 * w32, axis=1, keepdims=True))     # (C, 1)
    w_inv = (1.0 / jnp.maximum(w_norm, _NORM_EPS)).T                 # (1, C) f32
    w_s = weight.astype(matmul_dtype)                                # (C, D)
    if C_pad != C:
        w_s = jnp.pad(w_s, ((0, C_pad - C), (0, 0)))
        w_inv = jnp.pad(w_inv, ((0, 0), (0, C_pad - C)))

    e = embeddings.astype(jnp.float32)
    labels_2d = labels.astype(jnp.int32).reshape(B, 1)
    if B_pad != B:
        e = jnp.pad(e, ((0, B_pad - B), (0, 0)))
        labels_2d = jnp.pad(labels_2d, ((0, B_pad - B), (0, 0)))

    kernel = functools.partial(
        _arcface_kernel,
        s=float(s),
        s_cos_m=float(s) * math.cos(m),
        s_sin_m=float(s) * math.sin(m),
        num_classes=C, num_classes_padded=C_pad,
        num_rows=B, num_rows_padded=B_pad)

    out = pl.pallas_call(
        kernel,
        out_shape=jax.ShapeDtypeStruct((1, 1), jnp.float32),
        grid_spec=pltpu.PrefetchScalarGridSpec(
            num_scalar_prefetch=0,
            grid=(C_pad // c_tile,),
            in_specs=[
                pl.BlockSpec((B_pad, D), lambda j: (0, 0)),      # embeddings (resident)
                pl.BlockSpec((c_tile, D), lambda j: (j, 0)),     # weight tile (streamed)
                pl.BlockSpec((1, c_tile), lambda j: (0, j)),     # 1/||w|| tile
                pl.BlockSpec((B_pad, 1), lambda j: (0, 0)),      # labels (resident)
            ],
            out_specs=pl.BlockSpec((1, 1), lambda j: (0, 0)),
            scratch_shapes=[
                pltpu.VMEM((B_pad, D), matmul_dtype),   # normalized embeddings
                pltpu.VMEM((B_pad, 1), jnp.float32),    # running row max
                pltpu.VMEM((B_pad, 1), jnp.float32),    # running exp-sum
                pltpu.VMEM((B_pad, 1), jnp.float32),    # target logit
            ]),
        compiler_params=pltpu.CompilerParams(
            dimension_semantics=("arbitrary",),
            vmem_limit_bytes=48 * 1024 * 1024),
    )(e, w_s, w_inv, labels_2d)
    return out[0, 0]


def arcface_loss_ref(embeddings, weight, labels, *, s=30.0, m=0.5):
    """Pure-JAX reference mirroring the PyTorch module exactly."""
    e_n = embeddings / jnp.maximum(
        jnp.linalg.norm(embeddings, axis=1, keepdims=True), _NORM_EPS)
    w_n = weight / jnp.maximum(
        jnp.linalg.norm(weight, axis=1, keepdims=True), _NORM_EPS)
    cosine = e_n @ w_n.T
    theta = jnp.arccos(jnp.clip(cosine, -1 + _CLIP_EPS, 1 - _CLIP_EPS))
    one_hot = jax.nn.one_hot(labels, weight.shape[0], dtype=bool)
    logits = jnp.cos(jnp.where(one_hot, theta + m, theta)) * s
    lse = jax.scipy.special.logsumexp(logits, axis=1)
    tgt = jnp.take_along_axis(logits, labels[:, None], axis=1)[:, 0]
    return jnp.mean(lse - tgt)


if __name__ == "__main__":
    s_val, m_val = 30.0, 0.5
    root = jax.random.PRNGKey(0)
    k_case1, k_case2 = jax.random.split(root)

    def make_inputs(key, batch, feat_dim, num_classes):
        k_emb, k_w, k_lbl = jax.random.split(key, 3)
        emb = jax.random.normal(k_emb, (batch, feat_dim), dtype=jnp.float32)
        bound = math.sqrt(6.0 / (num_classes + feat_dim))   # xavier_uniform_
        w = jax.random.uniform(k_w, (num_classes, feat_dim), jnp.float32,
                               minval=-bound, maxval=bound)
        lbl = jax.random.randint(k_lbl, (batch,), 0, num_classes, dtype=jnp.int32)
        return emb, w, lbl

    # Case 1: module defaults (feat_dim=256, num_classes=100); batch=6 is not a
    # multiple of 8, exercising row padding + masked mean. Single class tile.
    emb1, w1, lbl1 = make_inputs(k_case1, 6, 256, 100)
    out1 = jax.block_until_ready(arcface_loss(emb1, w1, lbl1, s=s_val, m=m_val))
    ref1 = arcface_loss_ref(emb1, w1, lbl1, s=s_val, m=m_val)
    assert jnp.allclose(out1, ref1, rtol=1e-4, atol=1e-4), (out1, ref1)

    # Case 2: 1000 classes streamed as 128-wide tiles -> exercises the online
    # LSE accumulation across 8 grid steps and padded-class masking (1000->1024).
    emb2, w2, lbl2 = make_inputs(k_case2, 8, 256, 1000)
    out2 = jax.block_until_ready(
        arcface_loss(emb2, w2, lbl2, s=s_val, m=m_val, c_tile=128))
    ref2 = arcface_loss_ref(emb2, w2, lbl2, s=s_val, m=m_val)
    assert jnp.allclose(out2, ref2, rtol=1e-4, atol=1e-4), (out2, ref2)

    # Case 3: bf16 weight/embedding streaming (half the HBM bytes, native MXU
    # dtype) with f32 accumulation; looser tolerance for the bf16 operands.
    out3 = jax.block_until_ready(
        arcface_loss(emb2, w2, lbl2, s=s_val, m=m_val, c_tile=256,
                     matmul_dtype=jnp.bfloat16))
    assert jnp.allclose(out3, ref2, rtol=3e-2, atol=3e-2), (out3, ref2)

    print("KERNEL_OK")
</pallas_src>

<mosaic_0001>
module attributes {stable_mosaic.version = 11 : i64} {
  func.func @_arcface_kernel(%arg0: i32, %arg1: memref<8x256xf32, #tpu.memory_space<vmem>>, %arg2: memref<128x256xf32, #tpu.memory_space<vmem>>, %arg3: memref<1x128xf32, #tpu.memory_space<vmem>>, %arg4: memref<8x1xi32, #tpu.memory_space<vmem>>, %arg5: memref<1x1xf32, #tpu.memory_space<vmem>>, %arg6: memref<8x256xf32, #tpu.memory_space<vmem>>, %arg7: memref<8x1xf32, #tpu.memory_space<vmem>>, %arg8: memref<8x1xf32, #tpu.memory_space<vmem>>, %arg9: memref<8x1xf32, #tpu.memory_space<vmem>>) attributes {dimension_semantics = [#tpu.dimension_semantics<arbitrary>], iteration_bounds = array<i64: 1>, scalar_prefetch = 0 : i64, scratch_operands = 4 : i64, tpu.core_type = #tpu.core_type<tc>, window_params = [{pipeline_mode = #tpu.pipeline_mode<synchronous>, transform_indices = @transform_0, window_bounds = array<i64: 8, 256>}, {transform_indices = @transform_1, window_bounds = array<i64: 128, 256>}, {transform_indices = @transform_2, window_bounds = array<i64: 1, 128>}, {pipeline_mode = #tpu.pipeline_mode<synchronous>, transform_indices = @transform_3, window_bounds = array<i64: 8, 1>}, {pipeline_mode = #tpu.pipeline_mode<synchronous>, transform_indices = @transform_4, window_bounds = array<i64: 1, 1>}]} {
    %c0_i32 = arith.constant 0 : i32
    %0 = arith.cmpi eq, %arg0, %c0_i32 : i32
    %1 = arith.extui %0 : i1 to i32
    %c0_i32_0 = arith.constant 0 : i32
    %2 = arith.cmpi ne, %1, %c0_i32_0 : i32
    scf.if %2 {
      %c0_36 = arith.constant 0 : index
      %c0_37 = arith.constant 0 : index
      %65 = vector.load %arg1[%c0_36, %c0_37] : memref<8x256xf32, #tpu.memory_space<vmem>>, vector<8x256xf32>
      %66 = arith.mulf %65, %65 : vector<8x256xf32>
      %cst_38 = arith.constant dense<0.000000e+00> : vector<8xf32>
      %67 = vector.multi_reduction <add>, %66, %cst_38 [1] : vector<8x256xf32> to vector<8xf32>
      %68 = vector.shape_cast %67 : vector<8xf32> to vector<8x1xf32>
      %69 = math.sqrt %68 : vector<8x1xf32>
      %cst_39 = arith.constant 9.99999996E-13 : f32
      %70 = vector.broadcast %cst_39 : f32 to vector<8x1xf32>
      %71 = arith.maximumf %69, %70 : vector<8x1xf32>
      %72 = vector.broadcast %71 : vector<8x1xf32> to vector<8x256xf32>
      %73 = arith.divf %65, %72 : vector<8x256xf32>
      %c0_40 = arith.constant 0 : index
      %c0_41 = arith.constant 0 : index
      %74 = vector.load %arg6[%c0_40, %c0_41] : memref<8x256xf32, #tpu.memory_space<vmem>>, vector<8x256xf32>
      tpu.vector_store %arg6[%c0_40, %c0_41], %73 {strides = array<i32>} : memref<8x256xf32, #tpu.memory_space<vmem>>, vector<8x256xf32>,
      %cst_42 = arith.constant -1.000000e+30 : f32
      %75 = vector.broadcast %cst_42 : f32 to vector<8x1xf32>
      %c0_43 = arith.constant 0 : index
      %c0_44 = arith.constant 0 : index
      %76 = vector.load %arg7[%c0_43, %c0_44] : memref<8x1xf32, #tpu.memory_space<vmem>>, vector<8x1xf32>
      tpu.vector_store %arg7[%c0_43, %c0_44], %75 {strides = array<i32>} : memref<8x1xf32, #tpu.memory_space<vmem>>, vector<8x1xf32>,
      %cst_45 = arith.constant 0.000000e+00 : f32
      %77 = vector.broadcast %cst_45 : f32 to vector<8x1xf32>
      %c0_46 = arith.constant 0 : index
      %c0_47 = arith.constant 0 : index
      %78 = vector.load %arg8[%c0_46, %c0_47] : memref<8x1xf32, #tpu.memory_space<vmem>>, vector<8x1xf32>
      tpu.vector_store %arg8[%c0_46, %c0_47], %77 {strides = array<i32>} : memref<8x1xf32, #tpu.memory_space<vmem>>, vector<8x1xf32>,
      %cst_48 = arith.constant 0.000000e+00 : f32
      %79 = vector.broadcast %cst_48 : f32 to vector<8x1xf32>
      %c0_49 = arith.constant 0 : index
      %c0_50 = arith.constant 0 : index
      %80 = vector.load %arg9[%c0_49, %c0_50] : memref<8x1xf32, #tpu.memory_space<vmem>>, vector<8x1xf32>
      tpu.vector_store %arg9[%c0_49, %c0_50], %79 {strides = array<i32>} : memref<8x1xf32, #tpu.memory_space<vmem>>, vector<8x1xf32>,
    } else {
    }
    %c0 = arith.constant 0 : index
    %c0_1 = arith.constant 0 : index
    %3 = vector.load %arg6[%c0, %c0_1] : memref<8x256xf32, #tpu.memory_space<vmem>>, vector<8x256xf32>
    %c0_2 = arith.constant 0 : index
    %c0_3 = arith.constant 0 : index
    %4 = vector.load %arg2[%c0_2, %c0_3] : memref<128x256xf32, #tpu.memory_space<vmem>>, vector<128x256xf32>
    %cst = arith.constant dense<0.000000e+00> : vector<8x128xf32>
    %5 = tpu.matmul %3, %4, %cst {dimension_numbers = #tpu.dot_dimension_numbers<[1], [1], [0], [0], [0, 0, 1, 0], [], []>} : vector<8x256xf32>, vector<128x256xf32>, vector<8x128xf32> -> vector<8x128xf32>
    %c0_4 = arith.constant 0 : index
    %c0_5 = arith.constant 0 : index
    %6 = vector.load %arg3[%c0_4, %c0_5] : memref<1x128xf32, #tpu.memory_space<vmem>>, vector<1x128xf32>
    %7 = vector.broadcast %6 : vector<1x128xf32> to vector<8x128xf32>
    %8 = arith.mulf %5, %7 : vector<8x128xf32>
    %cst_6 = arith.constant -0.99999988 : f32
    %cst_7 = arith.constant 0.99999988 : f32
    %9 = vector.broadcast %cst_6 : f32 to vector<8x128xf32>
    %10 = arith.maximumf %9, %8 : vector<8x128xf32>
    %11 = vector.broadcast %cst_7 : f32 to vector<8x128xf32>
    %12 = arith.minimumf %11, %10 : vector<8x128xf32>
    %13 = arith.mulf %12, %12 : vector<8x128xf32>
    %cst_8 = arith.constant 1.000000e+00 : f32
    %14 = vector.broadcast %cst_8 : f32 to vector<8x128xf32>
    %15 = arith.subf %14, %13 : vector<8x128xf32>
    %cst_9 = arith.constant 0.000000e+00 : f32
    %16 = vector.broadcast %cst_9 : f32 to vector<8x128xf32>
    %17 = arith.maximumf %15, %16 : vector<8x128xf32>
    %18 = math.sqrt %17 : vector<8x128xf32>
    %cst_10 = arith.constant 3.000000e+01 : f32
    %19 = vector.broadcast %cst_10 : f32 to vector<8x128xf32>
    %20 = arith.mulf %12, %19 : vector<8x128xf32>
    %cst_11 = arith.constant 26.3274765 : f32
    %21 = vector.broadcast %cst_11 : f32 to vector<8x128xf32>
    %22 = arith.mulf %12, %21 : vector<8x128xf32>
    %cst_12 = arith.constant 14.3827658 : f32
    %23 = vector.broadcast %cst_12 : f32 to vector<8x128xf32>
    %24 = arith.mulf %18, %23 : vector<8x128xf32>
    %25 = arith.subf %22, %24 : vector<8x128xf32>
    %26 = tpu.iota {dimensions = array<i32: 1>} : vector<8x128xi32>
    %c128_i32 = arith.constant 128 : i32
    %27 = arith.muli %arg0, %c128_i32 : i32
    %28 = vector.broadcast %27 : i32 to vector<8x128xi32>
    %29 = arith.addi %26, %28 : vector<8x128xi32>
    %c0_13 = arith.constant 0 : index
    %c0_14 = arith.constant 0 : index
    %30 = vector.load %arg4[%c0_13, %c0_14] : memref<8x1xi32, #tpu.memory_space<vmem>>, vector<8x1xi32>
    %31 = vector.broadcast %30 : vector<8x1xi32> to vector<8x128xi32>
    %32 = arith.cmpi eq, %31, %29 : vector<8x128xi32>
    %33 = arith.select %32, %25, %20 : vector<8x128xi1>, vector<8x128xf32>
    %c100_i32 = arith.constant 100 : i32
    %34 = vector.broadcast %c100_i32 : i32 to vector<8x128xi32>
    %35 = arith.cmpi slt, %29, %34 : vector<8x128xi32>
    %cst_15 = arith.constant -1.000000e+30 : f32
    %36 = vector.broadcast %cst_15 : f32 to vector<8x128xf32>
    %37 = arith.select %35, %33, %36 : vector<8x128xi1>, vector<8x128xf32>
    %cst_16 = arith.constant dense<0xFF800000> : vector<8xf32>
    %38 = vector.multi_reduction <maximumf>, %37, %cst_16 [1] : vector<8x128xf32> to vector<8xf32>
    %39 = vector.shape_cast %38 : vector<8xf32> to vector<8x1xf32>
    %c0_17 = arith.constant 0 : index
    %c0_18 = arith.constant 0 : index
    %40 = vector.load %arg7[%c0_17, %c0_18] : memref<8x1xf32, #tpu.memory_space<vmem>>, vector<8x1xf32>
    %41 = arith.maximumf %40, %39 : vector<8x1xf32>
    %c0_19 = arith.constant 0 : index
    %c0_20 = arith.constant 0 : index
    %42 = vector.load %arg7[%c0_19, %c0_20] : memref<8x1xf32, #tpu.memory_space<vmem>>, vector<8x1xf32>
    %43 = arith.subf %42, %41 : vector<8x1xf32>
    %44 = math.exp %43 : vector<8x1xf32>
    %45 = vector.broadcast %41 : vector<8x1xf32> to vector<8x128xf32>
    %46 = arith.subf %37, %45 : vector<8x128xf32>
    %47 = math.exp %46 : vector<8x128xf32>
    %c0_21 = arith.constant 0 : index
    %c0_22 = arith.constant 0 : index
    %48 = vector.load %arg8[%c0_21, %c0_22] : memref<8x1xf32, #tpu.memory_space<vmem>>, vector<8x1xf32>
    %49 = arith.mulf %44, %48 : vector<8x1xf32>
    %cst_23 = arith.constant dense<0.000000e+00> : vector<8xf32>
    %50 = vector.multi_reduction <add>, %47, %cst_23 [1] : vector<8x128xf32> to vector<8xf32>
    %51 = vector.shape_cast %50 : vector<8xf32> to vector<8x1xf32>
    %52 = arith.addf %49, %51 : vector<8x1xf32>
    %c0_24 = arith.constant 0 : index
    %c0_25 = arith.constant 0 : index
    %53 = vector.load %arg8[%c0_24, %c0_25] : memref<8x1xf32, #tpu.memory_space<vmem>>, vector<8x1xf32>
    tpu.vector_store %arg8[%c0_24, %c0_25], %52 {strides = array<i32>} : memref<8x1xf32, #tpu.memory_space<vmem>>, vector<8x1xf32>,
    %c0_26 = arith.constant 0 : index
    %c0_27 = arith.constant 0 : index
    %54 = vector.load %arg9[%c0_26, %c0_27] : memref<8x1xf32, #tpu.memory_space<vmem>>, vector<8x1xf32>
    %cst_28 = arith.constant 0.000000e+00 : f32
    %55 = vector.broadcast %cst_28 : f32 to vector<8x128xf32>
    %56 = arith.select %32, %37, %55 : vector<8x128xi1>, vector<8x128xf32>
    %cst_29 = arith.constant dense<0.000000e+00> : vector<8xf32>
    %57 = vector.multi_reduction <add>, %56, %cst_29 [1] : vector<8x128xf32> to vector<8xf32>
    %58 = vector.shape_cast %57 : vector<8xf32> to vector<8x1xf32>
    %59 = arith.addf %54, %58 : vector<8x1xf32>
    %c0_30 = arith.constant 0 : index
    %c0_31 = arith.constant 0 : index
    %60 = vector.load %arg9[%c0_30, %c0_31] : memref<8x1xf32, #tpu.memory_space<vmem>>, vector<8x1xf32>
    tpu.vector_store %arg9[%c0_30, %c0_31], %59 {strides = array<i32>} : memref<8x1xf32, #tpu.memory_space<vmem>>, vector<8x1xf32>,
    %c0_32 = arith.constant 0 : index
    %c0_33 = arith.constant 0 : index
    %61 = vector.load %arg7[%c0_32, %c0_33] : memref<8x1xf32, #tpu.memory_space<vmem>>, vector<8x1xf32>
    tpu.vector_store %arg7[%c0_32, %c0_33], %41 {strides = array<i32>} : memref<8x1xf32, #tpu.memory_space<vmem>>, vector<8x1xf32>,
    %c0_i32_34 = arith.constant 0 : i32
    %62 = arith.cmpi eq, %arg0, %c0_i32_34 : i32
    %63 = arith.extui %62 : i1 to i32
    %c0_i32_35 = arith.constant 0 : i32
    %64 = arith.cmpi ne, %63, %c0_i32_35 : i32
    scf.if %64 {
      %c0_36 = arith.constant 0 : index
      %c0_37 = arith.constant 0 : index
      %65 = vector.load %arg7[%c0_36, %c0_37] : memref<8x1xf32, #tpu.memory_space<vmem>>, vector<8x1xf32>
      %c0_38 = arith.constant 0 : index
      %c0_39 = arith.constant 0 : index
      %66 = vector.load %arg8[%c0_38, %c0_39] : memref<8x1xf32, #tpu.memory_space<vmem>>, vector<8x1xf32>
      %67 = math.log %66 : vector<8x1xf32>
      %68 = arith.addf %65, %67 : vector<8x1xf32>
      %c0_40 = arith.constant 0 : index
      %c0_41 = arith.constant 0 : index
      %69 = vector.load %arg9[%c0_40, %c0_41] : memref<8x1xf32, #tpu.memory_space<vmem>>, vector<8x1xf32>
      %70 = arith.subf %68, %69 : vector<8x1xf32>
      %71 = tpu.iota {dimensions = array<i32: 0>} : vector<8x1xi32>
      %c6_i32 = arith.constant 6 : i32
      %72 = vector.broadcast %c6_i32 : i32 to vector<8x1xi32>
      %73 = arith.cmpi slt, %71, %72 : vector<8x1xi32>
      %cst_42 = arith.constant 0.000000e+00 : f32
      %74 = vector.broadcast %cst_42 : f32 to vector<8x1xf32>
      %75 = arith.select %73, %70, %74 : vector<8x1xi1>, vector<8x1xf32>
      %76 = vector.shape_cast %75 : vector<8x1xf32> to vector<1x8x1xf32>
      %cst_43 = arith.constant dense<0.000000e+00> : vector<1xf32>
      %77 = vector.multi_reduction <add>, %76, %cst_43 [1, 2] : vector<1x8x1xf32> to vector<1xf32>
      %78 = vector.shape_cast %77 : vector<1xf32> to vector<1x1x1xf32>
      %79 = vector.extract %78[0, 0, 0] : f32 from vector<1x1x1xf32>
      %80 = vector.broadcast %79 : f32 to vector<1x1xf32>
      %cst_44 = arith.constant 0.166666672 : f32
      %81 = vector.broadcast %cst_44 : f32 to vector<1x1xf32>
      %82 = arith.mulf %80, %81 : vector<1x1xf32>
      %c0_45 = arith.constant 0 : index
      %c0_46 = arith.constant 0 : index
      %83 = vector.load %arg5[%c0_45, %c0_46] : memref<1x1xf32, #tpu.memory_space<vmem>>, vector<1x1xf32>
      tpu.vector_store %arg5[%c0_45, %c0_46], %82 {strides = array<i32>} : memref<1x1xf32, #tpu.memory_space<vmem>>, vector<1x1xf32>,
    } else {
    }
    return
  }
  func.func @transform_0(%arg0: i32) -> (i32, i32) {
    %c0_i32 = arith.constant 0 : i32
    %c0_i32_0 = arith.constant 0 : i32
    %c0_i32_1 = arith.constant 0 : i32
    return %c0_i32, %c0_i32_0 : i32, i32
  }
  func.func @transform_1(%arg0: i32) -> (i32, i32) {
    %c0_i32 = arith.constant 0 : i32
    %c0_i32_0 = arith.constant 0 : i32
    return %arg0, %c0_i32 : i32, i32
  }
  func.func @transform_2(%arg0: i32) -> (i32, i32) {
    %c0_i32 = arith.constant 0 : i32
    %c0_i32_0 = arith.constant 0 : i32
    return %c0_i32, %arg0 : i32, i32
  }
  func.func @transform_3(%arg0: i32) -> (i32, i32) {
    %c0_i32 = arith.constant 0 : i32
    %c0_i32_0 = arith.constant 0 : i32
    %c0_i32_1 = arith.constant 0 : i32
    return %c0_i32, %c0_i32_0 : i32, i32
  }
  func.func @transform_4(%arg0: i32) -> (i32, i32) {
    %c0_i32 = arith.constant 0 : i32
    %c0_i32_0 = arith.constant 0 : i32
    %c0_i32_1 = arith.constant 0 : i32
    return %c0_i32, %c0_i32_0 : i32, i32
  }
}

</mosaic_0001>

<llo_original>
// kernel: tpu_custom_call.1
$region0: #{tpu_custom_call.1}
  #allocation0 [shape = 'u32[]', space=smem, size = 0x4, offset = 0x4, fixed_abs, tag = 'smem constant byte address 0x4 - core index']
  #allocation1 [shape = 'u32[72,128]{1,0:T(1,128)}', space=vmem, size = 0x9000, scoped, tag = 'internal scratch']
  #allocation2 [shape = 'f32[8,256]{1,0:T(8,128)}', space=vmem, size = 0x2000, scoped, tag = 'scratch operand']
  #allocation3 [shape = 'f32[8,1]{1,0:T(8,128)}', space=vmem, size = 0x1000, scoped, tag = 'scratch operand']
  #allocation4 [shape = 'f32[8,1]{1,0:T(8,128)}', space=vmem, size = 0x1000, scoped, tag = 'scratch operand']
  #allocation5 [shape = 'f32[8,1]{1,0:T(8,128)}', space=vmem, size = 0x1000, scoped, tag = 'scratch operand']
  %s0 = inlined_call_operand.hbm [shape: f32[8,256], index: 0, kind: input, shape index: {}]
  %s1 = inlined_call_operand.hbm [shape: f32[128,256], index: 1, kind: input, shape index: {}]
  %s2 = inlined_call_operand.vmem [shape: f32[1,128], index: 2, kind: input, shape index: {}]
  %s3 = inlined_call_operand.vmem [shape: s32[8,1], index: 3, kind: input, shape index: {}]
  %s4 = inlined_call_operand.hbm [shape: f32[1,1], index: 4, kind: output, shape index: {}]
  %s5 = sld [smem:[#allocation0]]
  $region42: #{tpu_custom_call.1} parent=0
    _
  %s7 = ssub.s32 1, %s5
  %s8 = scalar_select 0, %s7, %s5
  $region1: #{tpu_custom_call.1} parent=0
    #allocation6 [shape = 'u8[8192]{0}', space=vmem, size = 0x2000, scoped, tag = 'input window, operand 0, single buffered']
    #allocation7 [shape = 's32[1]{0}', space=sflag, size = 0x4, scoped, tag = 'scoped memory for tpu_custom_call.1']
    #allocation8 [shape = 's32[1]{0}', space=sflag, size = 0x4, scoped, tag = 'scoped memory for tpu_custom_call.1']
    #allocation9 [shape = 'u8[131072]{0}', space=vmem, size = 0x20000, scoped, tag = 'input window, operand 1, single buffered']
    #allocation10 [shape = 's32[1]{0}', space=sflag, size = 0x4, scoped, tag = 'scoped memory for tpu_custom_call.1']
    #allocation11 [shape = 'u8[512]{0}', space=vmem, size = 0x400, scoped, tag = 'output window, operand 0, single buffered']
    %9 = vsyncpa [#allocation7], 0
    %10 = vsyncpa [#allocation10], 0
    %11 = vsyncpa [#allocation8], 0
    // Predicated region
    $region2: #{tpu_custom_call.1} parent=1 // pred_check
      _
    $region3: #{tpu_custom_call.1} parent=1 // pred_check_branch
      %13 = sbr.rel (0) target = $region5
    $region4: #{tpu_custom_call.1} parent=1 // pred_region
      %15 = vsyncadd [#allocation7], 0
      %s17 = sshll.u32 %s0, 4
      %s18 = int_to_ptr.hbm [resolvable:$true] %s17
      %s19 = sshll.u32 [#allocation6], 4
      %s20 = int_to_ptr.vmem [resolvable:$true] %s19
      %22 = dma.hbm_to_vmem [thread:$0]  %s18, 256, %s20, [#allocation7]
    $region5: #{tpu_custom_call.1} parent=1 // pred_fallthru
      _
    // Predicated region
    $region6: #{tpu_custom_call.1} parent=1 // pred_check
      _
    $region7: #{tpu_custom_call.1} parent=1 // pred_check_branch
      %24 = sbr.rel (0) target = $region9
    $region8: #{tpu_custom_call.1} parent=1 // pred_region
      %26 = vsyncadd [#allocation10], 0
      %s27 = sshll.u32 %s1, 4
      %s28 = int_to_ptr.hbm [resolvable:$true] %s27
      %s29 = sshll.u32 [#allocation9], 4
      %s30 = int_to_ptr.vmem [resolvable:$true] %s29
      %35 = dma.hbm_to_vmem [thread:$0]  %s28, 4096, %s30, [#allocation10], 256, 256, 16
    $region9: #{tpu_custom_call.1} parent=1 // pred_fallthru
      _
    // Predicated region
    $region10: #{tpu_custom_call.1} parent=1 // pred_check
      _
    $region11: #{tpu_custom_call.1} parent=1 // pred_check_branch
      %37 = sbr.rel (0) target = $region13
    $region12: #{tpu_custom_call.1} parent=1 // pred_region
      _
    $region13: #{tpu_custom_call.1} parent=1 // pred_fallthru
      _
    // Predicated region
    $region14: #{tpu_custom_call.1} parent=1 // pred_check
      _
    $region15: #{tpu_custom_call.1} parent=1 // pred_check_branch
      %39 = sbr.rel (0) target = $region17
    $region16: #{tpu_custom_call.1} parent=1 // pred_region
      _
    $region17: #{tpu_custom_call.1} parent=1 // pred_fallthru
      _
    // Predicated region
    $region18: #{tpu_custom_call.1} parent=1 // pred_check
      _
    $region19: #{tpu_custom_call.1} parent=1 // pred_check_branch
      %41 = sbr.rel (0) target = $region21
    $region20: #{tpu_custom_call.1} parent=1 // pred_region
      %43 = dma.done [#allocation7], 256
    $region21: #{tpu_custom_call.1} parent=1 // pred_fallthru
      _
    // Predicated region
    $region22: #{tpu_custom_call.1} parent=1 // pred_check
      _
    $region23: #{tpu_custom_call.1} parent=1 // pred_check_branch
      %45 = sbr.rel (0) target = $region25
    $region24: #{tpu_custom_call.1} parent=1 // pred_region
      %47 = dma.done [#allocation10], 4096
    $region25: #{tpu_custom_call.1} parent=1 // pred_fallthru
      _
    %p48 = scmp.eq.s32.totalorder 0, 0
    // Predicated region
    $region26: #{tpu_custom_call.1} parent=1 // pred_check
      %p49 = pneg %p48
    $region27: #{tpu_custom_call.1} parent=1 // pred_check_branch
      %51 = sbr.rel (%p49) target = $region29
    $region28: #{tpu_custom_call.1} parent=1 // pred_region
      %v52 = vld [vmem:[#allocation6] sm:$0xff]
      %v53 = vld [vmem:[#allocation6 + $0x8] sm:$0xff]
      %v54 = vmul.f32 %v52, %v52
      %v55 = vmul.f32 %v53, %v53
      %v56 = vadd.f32 %v54, %v55
      %57 = vadd.xlane.f32.xlu0 %v56
      %v58 = vpop.xlane.xlu0 %57
      %v59 = vrsqrt.pop %v58
      %v60 = vmul.f32 %v59, %v58
      %v61 = vmul.f32 %v60, %v59
      %v62 = vmul.f32 0.5, %v61
      %v63 = vsub.f32 1.5, %v62
      %v64 = vmul.f32 %v59, %v63
      %v65 = vmul.f32 %v58, %v64
      %vm66 = vcmp.eq.f32.partialorder %v58, inf
      %v67 = vsel %vm66, %v58, %v65
      %vm68 = vcmp.eq.f32.partialorder %v58, 0.0
      %v69 = vand.u32 %v58, 2147483648
      %v70 = vsel %vm68, %v69, %v67
      %v71 = vmax.f32 %v70, 1e-12
      %v72 = vrcp.pop %v71
      %v73 = vmul.f32 %v71, %v72
      %v74 = vsub.f32 1.0, %v73
      %v75 = vmul.f32 %v72, %v74
      %v76 = vadd.f32 %v72, %v75
      %vm77 = vweird.f32 %v71
      %vm78 = vweird.f32 %v72
      %vm79 = vmor %vm77, %vm78
      %v80 = vsel %vm79, %v72, %v76
      %v81 = vand.u32 2147483647, %v71
      %vm82 = vcmp.eq.f32.partialorder %v81, 8.507059e+37
      %v83 = vand.u32 %v71, 2147483648
      %v84 = vor.u32 1.1754944e-38, %v83
      %v85 = vsel %vm82, %v84, %v80
      %v86 = vmul.f32 %v52, %v85
      %v87 = vmul.f32 %v53, %v85
      %88 = vst [vmem:[#allocation2] sm:$0xff] %v86
      %89 = vst [vmem:[#allocation2 + $0x8] sm:$0xff] %v87
      %vm90 = vcmask 7168
      %91 = vst.msk [vmem:[#allocation3] sm:$0xff] %vm90, -1e+30
      %92 = vst.msk [vmem:[#allocation4] sm:$0xff] %vm90, 0.0
      %93 = vst.msk [vmem:[#allocation5] sm:$0xff] %vm90, 0.0
    $region29: #{tpu_custom_call.1} parent=1 // pred_fallthru
      _
    %v94 = vld [vmem:[#allocation2] sm:$0xff]
    %v95 = vld [vmem:[#allocation2 + $0x8] sm:$0xff]
    %v96 = vld [vmem:[#allocation9] sm:$0xff]
    %v97 = vld [vmem:[#allocation9 + $0x8] sm:$0xff]
    %v98 = vld [vmem:[#allocation9 + $0x10] sm:$0xff]
    %v99 = vld [vmem:[#allocation9 + $0x18] sm:$0xff]
    %v100 = vld [vmem:[#allocation9 + $0x20] sm:$0xff]
    %v101 = vld [vmem:[#allocation9 + $0x28] sm:$0xff]
    %v102 = vld [vmem:[#allocation9 + $0x30] sm:$0xff]
    %v103 = vld [vmem:[#allocation9 + $0x38] sm:$0xff]
    %v104 = vld [vmem:[#allocation9 + $0x40] sm:$0xff]
    %v105 = vld [vmem:[#allocation9 + $0x48] sm:$0xff]
    %v106 = vld [vmem:[#allocation9 + $0x50] sm:$0xff]
    %v107 = vld [vmem:[#allocation9 + $0x58] sm:$0xff]
    %v108 = vld [vmem:[#allocation9 + $0x60] sm:$0xff]
    %v109 = vld [vmem:[#allocation9 + $0x68] sm:$0xff]
    %v110 = vld [vmem:[#allocation9 + $0x70] sm:$0xff]
    %v111 = vld [vmem:[#allocation9 + $0x78] sm:$0xff]
    %v112 = vld [vmem:[#allocation9 + $0x80] sm:$0xff]
    %v113 = vld [vmem:[#allocation9 + $0x88] sm:$0xff]
    %v114 = vld [vmem:[#allocation9 + $0x90] sm:$0xff]
    %v115 = vld [vmem:[#allocation9 + $0x98] sm:$0xff]
    %v116 = vld [vmem:[#allocation9 + $0xa0] sm:$0xff]
    %v117 = vld [vmem:[#allocation9 + $0xa8] sm:$0xff]
    %v118 = vld [vmem:[#allocation9 + $0xb0] sm:$0xff]
    %v119 = vld [vmem:[#allocation9 + $0xb8] sm:$0xff]
    %v120 = vld [vmem:[#allocation9 + $0xc0] sm:$0xff]
    %v121 = vld [vmem:[#allocation9 + $0xc8] sm:$0xff]
    %v122 = vld [vmem:[#allocation9 + $0xd0] sm:$0xff]
    %v123 = vld [vmem:[#allocation9 + $0xd8] sm:$0xff]
    %v124 = vld [vmem:[#allocation9 + $0xe0] sm:$0xff]
    %v125 = vld [vmem:[#allocation9 + $0xe8] sm:$0xff]
    %v126 = vld [vmem:[#allocation9 + $0xf0] sm:$0xff]
    %v127 = vld [vmem:[#allocation9 + $0xf8] sm:$0xff]
    %128 = vmatpush.xpose.msra.mxu0 %v126
    %129 = vmatpush.xpose.msra.mxu0 %v124
    %130 = vmatpush.xpose.msra.mxu0 %v122
    %131 = vmatpush.xpose.msra.mxu0 %v120
    %132 = vmatpush.xpose.msra.mxu0 %v118
    %133 = vmatpush.xpose.msra.mxu0 %v116
    %134 = vmatpush.xpose.msra.mxu0 %v114
    %135 = vmatpush.xpose.msra.mxu0 %v112
    %136 = vmatpush.xpose.msra.mxu0 %v110
    %137 = vmatpush.xpose.msra.mxu0 %v108
    %138 = vmatpush.xpose.msra.mxu0 %v106
    %139 = vmatpush.xpose.msra.mxu0 %v104
    %140 = vmatpush.xpose.msra.mxu0 %v102
    %141 = vmatpush.xpose.msra.mxu0 %v100
    %142 = vmatpush.xpose.msra.mxu0 %v98
    %143 = vmatpush.xpose.msra.mxu0 %v96
    %144 = vmatmul.f32.gmra.mxu0 %v94
    %v145 = vpop.f32.mrf.mxu0
    %v146 = vadd.f32 0.0, %v145
    %147 = vdwg.mxu0
    %148 = vmatpush.xpose.msra.mxu0 %v127
    %149 = vmatpush.xpose.msra.mxu0 %v125
    %150 = vmatpush.xpose.msra.mxu0 %v123
    %151 = vmatpush.xpose.msra.mxu0 %v121
    %152 = vmatpush.xpose.msra.mxu0 %v119
    %153 = vmatpush.xpose.msra.mxu0 %v117
    %154 = vmatpush.xpose.msra.mxu0 %v115
    %155 = vmatpush.xpose.msra.mxu0 %v113
    %156 = vmatpush.xpose.msra.mxu0 %v111
    %157 = vmatpush.xpose.msra.mxu0 %v109
    %158 = vmatpush.xpose.msra.mxu0 %v107
    %159 = vmatpush.xpose.msra.mxu0 %v105
    %160 = vmatpush.xpose.msra.mxu0 %v103
    %161 = vmatpush.xpose.msra.mxu0 %v101
    %162 = vmatpush.xpose.msra.mxu0 %v99
    %163 = vmatpush.xpose.msra.mxu0 %v97
    %164 = vmatmul.f32.gmra.mxu0 %v95
    %v165 = vpop.f32.mrf.mxu0
    %v166 = vadd.f32 %v146, %v165
    %167 = vdwg.mxu0
    %v168 = vld [vmem:[%s2] sm:$0x1]
    %v170 = vperm.slane %v168, 0
    %v172 = vmul.f32 %v166, %v170
    %v173 = vmax.f32 %v172, -0.9999999
    %v174 = vmin.f32 %v173, 0.9999999
    %v175 = vmul.f32 %v174, %v174
    %v176 = vsub.f32 1.0, %v175
    %v177 = vmax.f32 %v176, 0.0
    %v178 = vrsqrt.pop %v177
    %v179 = vmul.f32 %v178, %v177
    %v180 = vmul.f32 %v179, %v178
    %v181 = vmul.f32 0.5, %v180
    %v182 = vsub.f32 1.5, %v181
    %v183 = vmul.f32 %v178, %v182
    %v184 = vmul.f32 %v177, %v183
    %vm185 = vcmp.eq.f32.partialorder %v177, inf
    %v186 = vsel %vm185, %v177, %v184
    %vm187 = vcmp.eq.f32.partialorder %v177, 0.0
    %v188 = vand.u32 %v177, 2147483648
    %v189 = vsel %vm187, %v188, %v186
    %v190 = vmul.f32 %v174, 30.0
    %v191 = vmul.f32 %v174, 26.327477
    %v192 = vmul.f32 %v189, 14.382766
    %v193 = vsub.f32 %v191, %v192
    %v194 = vlaneseq
    %v195 = vand.u32 %v194, 127
    %s196 = smul.u32 0, 128
    %v197 = vstv %s196
    %v198 = vadd.s32 %v195, %v197
    %v199 = vld [vmem:[%s3] sm:$0xff]
    %200 = vset.pattern.permute.xlu0 0
    %201 = vperm.xlu0 %200, %v199
    %v202 = vpop.permute.xlu0 %201
    %vm203 = vcmp.eq.s32.totalorder %v202, %v198
    %v204 = vsel %vm203, %v193, %v190
    %vm205 = vcmp.lt.s32.totalorder %v198, 100
    %v206 = vsel %vm205, %v204, -1e+30
    %207 = vmax.xlane.f32.xlu0 %v206
    %v208 = vpop.xlane.xlu0 %207
    %v209 = vld [vmem:[#allocation3] sm:$0xff]
    %v210 = vmax.f32 %v209, %v208
    %v211 = vsub.f32 %v209, %v210
    %v212 = vmul.f32 %v211, 1.442695
    %v213 = vpow.pop %v212
    %215 = vset.pattern.permute.xlu0 0
    %216 = vperm.xlu0 %215, %v210
    %v217 = vpop.permute.xlu0 %216
    %v219 = vsub.f32 %v206, %v217
    %v220 = vmul.f32 %v219, 1.442695
    %v221 = vpow.pop %v220
    %v222 = vld [vmem:[#allocation4] sm:$0xff]
    %v223 = vmul.f32 %v213, %v222
    %224 = vadd.xlane.f32.xlu0 %v221
    %v225 = vpop.xlane.xlu0 %224
    %v226 = vadd.f32 %v223, %v225
    %vm227 = vcmask 7168
    %228 = vst.msk [vmem:[#allocation4] sm:$0xff] %vm227, %v226
    %v229 = vld [vmem:[#allocation5] sm:$0xff]
    %v230 = vsel %vm203, %v206, 0.0
    %231 = vadd.xlane.f32.xlu0 %v230
    %v232 = vpop.xlane.xlu0 %231
    %v233 = vadd.f32 %v229, %v232
    %234 = vst.msk [vmem:[#allocation5] sm:$0xff] %vm227, %v233
    %235 = vst.msk [vmem:[#allocation3] sm:$0xff] %vm227, %v210
    // Predicated region
    $region30: #{tpu_custom_call.1} parent=1 // pred_check
      %p236 = pneg %p48
    $region31: #{tpu_custom_call.1} parent=1 // pred_check_branch
      %238 = sbr.rel (%p236) target = $region33
    $region32: #{tpu_custom_call.1} parent=1 // pred_region
      %v239 = vld [vmem:[#allocation3] sm:$0xff]
      %v240 = vld [vmem:[#allocation4] sm:$0xff]
      %v241 = vlog2.pop %v240
      %v242 = vmul.f32 %v241, 0.6931472
      %v243 = vadd.f32 %v239, %v242
      %v244 = vld [vmem:[#allocation5] sm:$0xff]
      %v245 = vsub.f32 %v243, %v244
      %v246 = vlaneseq
      %v247 = vshrl.u32 %v246, 7
      %vm248 = vcmp.lt.s32.totalorder %v247, 6
      %v249 = vsel %vm248, %v245, 0.0
      %v250 = vsel %vm227, %v249, 0.0
      %251 = vadd.xlane.f32.xlu0 %v250
      %v252 = vpop.xlane.xlu0 %251
      %v253 = vrot.slane %v252, 4
      %v254 = vadd.f32 %v252, %v253
      %v255 = vrot.slane %v254, 2
      %v256 = vadd.f32 %v254, %v255
      %v257 = vrot.slane %v256, 1
      %v258 = vadd.f32 %v256, %v257
      %s259 = vtos %v258
      %v260 = vstv %s259
      %v261 = vmul.f32 %v260, 0.16666667
      %vm262 = vcmask 0
      %263 = vst.msk [vmem:[#allocation11] sm:$0x1] %vm262, %v261
    $region33: #{tpu_custom_call.1} parent=1 // pred_fallthru
      _
    // Predicated region
    $region34: #{tpu_custom_call.1} parent=1 // pred_check
      _
    $region35: #{tpu_custom_call.1} parent=1 // pred_check_branch
      %265 = sbr.rel (0) target = $region37
    $region36: #{tpu_custom_call.1} parent=1 // pred_region
      %267 = vsyncadd [#allocation8], 0
      %s269 = sshll.u32 [#allocation11], 4
      %s270 = int_to_ptr.vmem [resolvable:$true] %s269
      %s271 = sshll.u32 %s4, 4
      %s272 = int_to_ptr.hbm [resolvable:$true] %s271
      %274 = dma.vmem_to_hbm [thread:$0]  %s270, 16, %s272, [#allocation8]
    $region37: #{tpu_custom_call.1} parent=1 // pred_fallthru
      _
    // Predicated region
    $region38: #{tpu_custom_call.1} parent=1 // pred_check
      _
    $region39: #{tpu_custom_call.1} parent=1 // pred_check_branch
      %276 = sbr.rel (0) target = $region41
    $region40: #{tpu_custom_call.1} parent=1 // pred_region
      %278 = dma.done [#allocation8], 16
    $region41: #{tpu_custom_call.1} parent=1 // pred_fallthru
      _
    %279 = vsyncpa [#allocation7], 1
    %280 = vsyncpa [#allocation10], 1
    %281 = vsyncpa [#allocation8], 1

</llo_original>
